<compile_context>
chip_gen: v7x
topology: tpu7x:2x2x1
jax: 0.10.0
libtpu: 0.0.40
codegen_flags: <defaults>
</compile_context>

<pallas_src>
import jax
import jax.numpy as jnp
from jax.experimental import pallas as pl
from jax.experimental.pallas import tpu as pltpu

# (in_features, out_features) per layer, PyTorch order.
LAYER_DIMS = ((8, 6), (6, 4), (4, 2), (2, 1))


def mlp_kernel(x_ref,
               w1_ref, b1_ref, w2_ref, b2_ref, w3_ref, b3_ref, w4_ref, b4_ref,
               o_ref):
    # x tile: (8, S, L) f32.  Each feature row is a dense (S, L) slab, i.e.
    # S*L/1024 fully-packed vregs per VPU/EUP op.
    rows = [x_ref[i] for i in range(8)]                # 8 x (S, L)

    layer_refs = ((w1_ref, b1_ref), (w2_ref, b2_ref),
                  (w3_ref, b3_ref), (w4_ref, b4_ref))
    for (w_ref, b_ref), (in_dim, out_dim) in zip(layer_refs, LAYER_DIMS):
        new_rows = []
        for o in range(out_dim):
            # acc = b'[o] + sum_i W'[o, i] * t_prev[i]   (SMEM scalar reads ->
            # lane-splat VPU MACs on dense (S, L) operands)
            acc = rows[0] * w_ref[o, 0]
            for i in range(1, in_dim):
                acc = acc + rows[i] * w_ref[o, i]
            acc = acc + b_ref[o]
            # Weights/biases are pre-folded on the host so that
            # tanh(acc) == tanh(0.5 * z_layer); the 0.5*(.)+0.5 of the sigmoid
            # is absorbed into the *next* layer's weights (EUP-only activation).
            new_rows.append(jnp.tanh(acc))
        rows = new_rows

    # Only the final layer applies the sigmoid affine explicitly.
    o_ref[...] = (0.5 * (rows[0] + 1.0)).astype(o_ref.dtype)   # (S, L), dense


def _fold_params(params):
    """Fold sigmoid affine constants into the weights (host-side, exact math).

    sigmoid(z) = 0.5 * (tanh(0.5*z) + 1).  The kernel computes t_l = tanh(u_l):
      layer 1 : u_1 = 0.5*W_1 x + 0.5*b_1
      layer l : u_l = 0.25*W_l t_{l-1} + (0.25*W_l @ 1 + 0.5*b_l)
    and the final output is 0.5*(t_4 + 1) == sigmoid(z_4).
    """
    folded = []
    w, b = params["w1"], params["b1"]
    folded.append((0.5 * w, 0.5 * b))
    for idx in range(2, 5):
        w, b = params[f"w{idx}"], params[f"b{idx}"]
        folded.append((0.25 * w, 0.25 * jnp.sum(w, axis=1) + 0.5 * b))
    return folded


def mlp_forward(x, params, *, tile_s=64, tile_l=1024):
    """x: (B, 8) float32.  params: PyTorch-layout w{k}: (out, in), b{k}: (out,)."""
    B, F = x.shape
    assert F == 8

    # Lane width L (multiple of 128) and sublane depth S (multiple of 8),
    # clamped to the (rounded-up) batch so small batches stay small.
    L = max(128, min((tile_l // 128) * 128, pl.cdiv(B, 128) * 128))
    rows_needed = pl.cdiv(B, L)
    S = max(8, min((tile_s // 8) * 8, pl.cdiv(rows_needed, 8) * 8))
    rows_pad = pl.cdiv(rows_needed, S) * S
    b_pad = rows_pad * L
    grid = (rows_pad // S,)

    # Transpose so batch maps to (sublane, lane); keep f32 (compute-bound kernel).
    xt = x.T.astype(jnp.float32)                       # (8, B)
    if b_pad != B:
        xt = jnp.pad(xt, ((0, 0), (0, b_pad - B)))     # padded lanes -> bias chains (finite)
    x3 = xt.reshape(8, rows_pad, L)                    # sample s -> (row s//L, lane s%L)

    fw = _fold_params(params)
    flat_params = []
    for w, b in fw:
        flat_params += [w, b]

    smem = pl.BlockSpec(memory_space=pltpu.MemorySpace.SMEM)
    in_specs = [pl.BlockSpec((8, S, L), lambda i: (0, i, 0))] + [smem] * 8
    out_specs = pl.BlockSpec((S, L), lambda i: (i, 0))

    out = pl.pallas_call(
        mlp_kernel,
        out_shape=jax.ShapeDtypeStruct((rows_pad, L), jnp.float32),
        grid_spec=pltpu.PrefetchScalarGridSpec(
            num_scalar_prefetch=0,
            grid=grid,
            in_specs=in_specs,
            out_specs=out_specs,
        ),
        compiler_params=pltpu.CompilerParams(
            dimension_semantics=("parallel",)),
    )(x3, *flat_params)

    return out.reshape(-1)[:B].reshape(B, 1)


def init_params(key):
    """torch.nn.Linear-style init, stored in PyTorch layout: W (out, in), b (out,)."""
    params = {}
    for idx, (fan_in, fan_out) in enumerate(LAYER_DIMS, start=1):
        key, kw, kb = jax.random.split(key, 3)
        bound = float(fan_in) ** -0.5
        params[f"w{idx}"] = jax.random.uniform(
            kw, (fan_out, fan_in), jnp.float32, minval=-bound, maxval=bound)
        params[f"b{idx}"] = jax.random.uniform(
            kb, (fan_out,), jnp.float32, minval=-bound, maxval=bound)
    return params


def reference_forward(x, params):
    h = x
    for idx in range(1, 5):
        h = jax.nn.sigmoid(h @ params[f"w{idx}"].T + params[f"b{idx}"])
    return h


if __name__ == "__main__":
    key = jax.random.PRNGKey(0)
    kp, kx = jax.random.split(key)
    params = init_params(kp)

    B = 256  # small demo batch; wrapper auto-shrinks the tile (S=8, L=256 here)
    x = jax.random.normal(kx, (B, 8), jnp.float32)

    out = mlp_forward(x, params)
    out = jax.block_until_ready(out)
    assert out.shape == (B, 1)

    # f32 input is streamed unmodified now -> compare directly against the
    # exact (PyTorch-equivalent) f32 reference.
    ref = reference_forward(x, params)
    max_err = float(jnp.max(jnp.abs(out - ref)))
    assert max_err < 1e-5, f"max abs error {max_err}"

    print("KERNEL_OK")
</pallas_src>

<mosaic_0001>
module attributes {stable_mosaic.version = 11 : i64} {
  func.func @mlp_kernel(%arg0: i32, %arg1: memref<8x8x256xf32, #tpu.memory_space<vmem>>, %arg2: memref<6x8xf32, #tpu.memory_space<smem>>, %arg3: memref<6xf32, #tpu.memory_space<smem>>, %arg4: memref<4x6xf32, #tpu.memory_space<smem>>, %arg5: memref<4xf32, #tpu.memory_space<smem>>, %arg6: memref<2x4xf32, #tpu.memory_space<smem>>, %arg7: memref<2xf32, #tpu.memory_space<smem>>, %arg8: memref<1x2xf32, #tpu.memory_space<smem>>, %arg9: memref<1xf32, #tpu.memory_space<smem>>, %arg10: memref<8x256xf32, #tpu.memory_space<vmem>>) attributes {dimension_semantics = [#tpu.dimension_semantics<parallel>], iteration_bounds = array<i64: 1>, scalar_prefetch = 0 : i64, scratch_operands = 0 : i64, tpu.core_type = #tpu.core_type<tc>, window_params = [{transform_indices = @transform_0, window_bounds = array<i64: 8, 8, 256>}, {transform_indices = @transform_1, window_bounds = array<i64: 6, 8>}, {transform_indices = @transform_2, window_bounds = array<i64: 6>}, {transform_indices = @transform_3, window_bounds = array<i64: 4, 6>}, {transform_indices = @transform_4, window_bounds = array<i64: 4>}, {transform_indices = @transform_5, window_bounds = array<i64: 2, 4>}, {transform_indices = @transform_6, window_bounds = array<i64: 2>}, {transform_indices = @transform_7, window_bounds = array<i64: 1, 2>}, {transform_indices = @transform_8, window_bounds = array<i64: 1>}, {transform_indices = @transform_9, window_bounds = array<i64: 8, 256>}]} {
    %c0 = arith.constant 0 : index
    %c0_0 = arith.constant 0 : index
    %c0_1 = arith.constant 0 : index
    %0 = vector.load %arg1[%c0, %c0_0, %c0_1] : memref<8x8x256xf32, #tpu.memory_space<vmem>>, vector<1x8x256xf32>
    %1 = vector.shape_cast %0 : vector<1x8x256xf32> to vector<8x256xf32>
    %c1 = arith.constant 1 : index
    %c0_2 = arith.constant 0 : index
    %c0_3 = arith.constant 0 : index
    %2 = vector.load %arg1[%c1, %c0_2, %c0_3] : memref<8x8x256xf32, #tpu.memory_space<vmem>>, vector<1x8x256xf32>
    %3 = vector.shape_cast %2 : vector<1x8x256xf32> to vector<8x256xf32>
    %c2 = arith.constant 2 : index
    %c0_4 = arith.constant 0 : index
    %c0_5 = arith.constant 0 : index
    %4 = vector.load %arg1[%c2, %c0_4, %c0_5] : memref<8x8x256xf32, #tpu.memory_space<vmem>>, vector<1x8x256xf32>
    %5 = vector.shape_cast %4 : vector<1x8x256xf32> to vector<8x256xf32>
    %c3 = arith.constant 3 : index
    %c0_6 = arith.constant 0 : index
    %c0_7 = arith.constant 0 : index
    %6 = vector.load %arg1[%c3, %c0_6, %c0_7] : memref<8x8x256xf32, #tpu.memory_space<vmem>>, vector<1x8x256xf32>
    %7 = vector.shape_cast %6 : vector<1x8x256xf32> to vector<8x256xf32>
    %c4 = arith.constant 4 : index
    %c0_8 = arith.constant 0 : index
    %c0_9 = arith.constant 0 : index
    %8 = vector.load %arg1[%c4, %c0_8, %c0_9] : memref<8x8x256xf32, #tpu.memory_space<vmem>>, vector<1x8x256xf32>
    %9 = vector.shape_cast %8 : vector<1x8x256xf32> to vector<8x256xf32>
    %c5 = arith.constant 5 : index
    %c0_10 = arith.constant 0 : index
    %c0_11 = arith.constant 0 : index
    %10 = vector.load %arg1[%c5, %c0_10, %c0_11] : memref<8x8x256xf32, #tpu.memory_space<vmem>>, vector<1x8x256xf32>
    %11 = vector.shape_cast %10 : vector<1x8x256xf32> to vector<8x256xf32>
    %c6 = arith.constant 6 : index
    %c0_12 = arith.constant 0 : index
    %c0_13 = arith.constant 0 : index
    %12 = vector.load %arg1[%c6, %c0_12, %c0_13] : memref<8x8x256xf32, #tpu.memory_space<vmem>>, vector<1x8x256xf32>
    %13 = vector.shape_cast %12 : vector<1x8x256xf32> to vector<8x256xf32>
    %c7 = arith.constant 7 : index
    %c0_14 = arith.constant 0 : index
    %c0_15 = arith.constant 0 : index
    %14 = vector.load %arg1[%c7, %c0_14, %c0_15] : memref<8x8x256xf32, #tpu.memory_space<vmem>>, vector<1x8x256xf32>
    %15 = vector.shape_cast %14 : vector<1x8x256xf32> to vector<8x256xf32>
    %c0_16 = arith.constant 0 : index
    %c0_17 = arith.constant 0 : index
    %16 = memref.load %arg2[%c0_16, %c0_17] : memref<6x8xf32, #tpu.memory_space<smem>>
    %17 = vector.broadcast %16 : f32 to vector<8x256xf32>
    %18 = arith.mulf %1, %17 : vector<8x256xf32>
    %c0_18 = arith.constant 0 : index
    %c1_19 = arith.constant 1 : index
    %19 = memref.load %arg2[%c0_18, %c1_19] : memref<6x8xf32, #tpu.memory_space<smem>>
    %20 = vector.broadcast %19 : f32 to vector<8x256xf32>
    %21 = arith.mulf %3, %20 : vector<8x256xf32>
    %22 = arith.addf %18, %21 : vector<8x256xf32>
    %c0_20 = arith.constant 0 : index
    %c2_21 = arith.constant 2 : index
    %23 = memref.load %arg2[%c0_20, %c2_21] : memref<6x8xf32, #tpu.memory_space<smem>>
    %24 = vector.broadcast %23 : f32 to vector<8x256xf32>
    %25 = arith.mulf %5, %24 : vector<8x256xf32>
    %26 = arith.addf %22, %25 : vector<8x256xf32>
    %c0_22 = arith.constant 0 : index
    %c3_23 = arith.constant 3 : index
    %27 = memref.load %arg2[%c0_22, %c3_23] : memref<6x8xf32, #tpu.memory_space<smem>>
    %28 = vector.broadcast %27 : f32 to vector<8x256xf32>
    %29 = arith.mulf %7, %28 : vector<8x256xf32>
    %30 = arith.addf %26, %29 : vector<8x256xf32>
    %c0_24 = arith.constant 0 : index
    %c4_25 = arith.constant 4 : index
    %31 = memref.load %arg2[%c0_24, %c4_25] : memref<6x8xf32, #tpu.memory_space<smem>>
    %32 = vector.broadcast %31 : f32 to vector<8x256xf32>
    %33 = arith.mulf %9, %32 : vector<8x256xf32>
    %34 = arith.addf %30, %33 : vector<8x256xf32>
    %c0_26 = arith.constant 0 : index
    %c5_27 = arith.constant 5 : index
    %35 = memref.load %arg2[%c0_26, %c5_27] : memref<6x8xf32, #tpu.memory_space<smem>>
    %36 = vector.broadcast %35 : f32 to vector<8x256xf32>
    %37 = arith.mulf %11, %36 : vector<8x256xf32>
    %38 = arith.addf %34, %37 : vector<8x256xf32>
    %c0_28 = arith.constant 0 : index
    %c6_29 = arith.constant 6 : index
    %39 = memref.load %arg2[%c0_28, %c6_29] : memref<6x8xf32, #tpu.memory_space<smem>>
    %40 = vector.broadcast %39 : f32 to vector<8x256xf32>
    %41 = arith.mulf %13, %40 : vector<8x256xf32>
    %42 = arith.addf %38, %41 : vector<8x256xf32>
    %c0_30 = arith.constant 0 : index
    %c7_31 = arith.constant 7 : index
    %43 = memref.load %arg2[%c0_30, %c7_31] : memref<6x8xf32, #tpu.memory_space<smem>>
    %44 = vector.broadcast %43 : f32 to vector<8x256xf32>
    %45 = arith.mulf %15, %44 : vector<8x256xf32>
    %46 = arith.addf %42, %45 : vector<8x256xf32>
    %c0_32 = arith.constant 0 : index
    %47 = memref.load %arg3[%c0_32] : memref<6xf32, #tpu.memory_space<smem>>
    %48 = vector.broadcast %47 : f32 to vector<8x256xf32>
    %49 = arith.addf %46, %48 : vector<8x256xf32>
    %50 = math.tanh %49 : vector<8x256xf32>
    %c1_33 = arith.constant 1 : index
    %c0_34 = arith.constant 0 : index
    %51 = memref.load %arg2[%c1_33, %c0_34] : memref<6x8xf32, #tpu.memory_space<smem>>
    %52 = vector.broadcast %51 : f32 to vector<8x256xf32>
    %53 = arith.mulf %1, %52 : vector<8x256xf32>
    %c1_35 = arith.constant 1 : index
    %c1_36 = arith.constant 1 : index
    %54 = memref.load %arg2[%c1_35, %c1_36] : memref<6x8xf32, #tpu.memory_space<smem>>
    %55 = vector.broadcast %54 : f32 to vector<8x256xf32>
    %56 = arith.mulf %3, %55 : vector<8x256xf32>
    %57 = arith.addf %53, %56 : vector<8x256xf32>
    %c1_37 = arith.constant 1 : index
    %c2_38 = arith.constant 2 : index
    %58 = memref.load %arg2[%c1_37, %c2_38] : memref<6x8xf32, #tpu.memory_space<smem>>
    %59 = vector.broadcast %58 : f32 to vector<8x256xf32>
    %60 = arith.mulf %5, %59 : vector<8x256xf32>
    %61 = arith.addf %57, %60 : vector<8x256xf32>
    %c1_39 = arith.constant 1 : index
    %c3_40 = arith.constant 3 : index
    %62 = memref.load %arg2[%c1_39, %c3_40] : memref<6x8xf32, #tpu.memory_space<smem>>
    %63 = vector.broadcast %62 : f32 to vector<8x256xf32>
    %64 = arith.mulf %7, %63 : vector<8x256xf32>
    %65 = arith.addf %61, %64 : vector<8x256xf32>
    %c1_41 = arith.constant 1 : index
    %c4_42 = arith.constant 4 : index
    %66 = memref.load %arg2[%c1_41, %c4_42] : memref<6x8xf32, #tpu.memory_space<smem>>
    %67 = vector.broadcast %66 : f32 to vector<8x256xf32>
    %68 = arith.mulf %9, %67 : vector<8x256xf32>
    %69 = arith.addf %65, %68 : vector<8x256xf32>
    %c1_43 = arith.constant 1 : index
    %c5_44 = arith.constant 5 : index
    %70 = memref.load %arg2[%c1_43, %c5_44] : memref<6x8xf32, #tpu.memory_space<smem>>
    %71 = vector.broadcast %70 : f32 to vector<8x256xf32>
    %72 = arith.mulf %11, %71 : vector<8x256xf32>
    %73 = arith.addf %69, %72 : vector<8x256xf32>
    %c1_45 = arith.constant 1 : index
    %c6_46 = arith.constant 6 : index
    %74 = memref.load %arg2[%c1_45, %c6_46] : memref<6x8xf32, #tpu.memory_space<smem>>
    %75 = vector.broadcast %74 : f32 to vector<8x256xf32>
    %76 = arith.mulf %13, %75 : vector<8x256xf32>
    %77 = arith.addf %73, %76 : vector<8x256xf32>
    %c1_47 = arith.constant 1 : index
    %c7_48 = arith.constant 7 : index
    %78 = memref.load %arg2[%c1_47, %c7_48] : memref<6x8xf32, #tpu.memory_space<smem>>
    %79 = vector.broadcast %78 : f32 to vector<8x256xf32>
    %80 = arith.mulf %15, %79 : vector<8x256xf32>
    %81 = arith.addf %77, %80 : vector<8x256xf32>
    %c1_49 = arith.constant 1 : index
    %82 = memref.load %arg3[%c1_49] : memref<6xf32, #tpu.memory_space<smem>>
    %83 = vector.broadcast %82 : f32 to vector<8x256xf32>
    %84 = arith.addf %81, %83 : vector<8x256xf32>
    %85 = math.tanh %84 : vector<8x256xf32>
    %c2_50 = arith.constant 2 : index
    %c0_51 = arith.constant 0 : index
    %86 = memref.load %arg2[%c2_50, %c0_51] : memref<6x8xf32, #tpu.memory_space<smem>>
    %87 = vector.broadcast %86 : f32 to vector<8x256xf32>
    %88 = arith.mulf %1, %87 : vector<8x256xf32>
    %c2_52 = arith.constant 2 : index
    %c1_53 = arith.constant 1 : index
    %89 = memref.load %arg2[%c2_52, %c1_53] : memref<6x8xf32, #tpu.memory_space<smem>>
    %90 = vector.broadcast %89 : f32 to vector<8x256xf32>
    %91 = arith.mulf %3, %90 : vector<8x256xf32>
    %92 = arith.addf %88, %91 : vector<8x256xf32>
    %c2_54 = arith.constant 2 : index
    %c2_55 = arith.constant 2 : index
    %93 = memref.load %arg2[%c2_54, %c2_55] : memref<6x8xf32, #tpu.memory_space<smem>>
    %94 = vector.broadcast %93 : f32 to vector<8x256xf32>
    %95 = arith.mulf %5, %94 : vector<8x256xf32>
    %96 = arith.addf %92, %95 : vector<8x256xf32>
    %c2_56 = arith.constant 2 : index
    %c3_57 = arith.constant 3 : index
    %97 = memref.load %arg2[%c2_56, %c3_57] : memref<6x8xf32, #tpu.memory_space<smem>>
    %98 = vector.broadcast %97 : f32 to vector<8x256xf32>
    %99 = arith.mulf %7, %98 : vector<8x256xf32>
    %100 = arith.addf %96, %99 : vector<8x256xf32>
    %c2_58 = arith.constant 2 : index
    %c4_59 = arith.constant 4 : index
    %101 = memref.load %arg2[%c2_58, %c4_59] : memref<6x8xf32, #tpu.memory_space<smem>>
    %102 = vector.broadcast %101 : f32 to vector<8x256xf32>
    %103 = arith.mulf %9, %102 : vector<8x256xf32>
    %104 = arith.addf %100, %103 : vector<8x256xf32>
    %c2_60 = arith.constant 2 : index
    %c5_61 = arith.constant 5 : index
    %105 = memref.load %arg2[%c2_60, %c5_61] : memref<6x8xf32, #tpu.memory_space<smem>>
    %106 = vector.broadcast %105 : f32 to vector<8x256xf32>
    %107 = arith.mulf %11, %106 : vector<8x256xf32>
    %108 = arith.addf %104, %107 : vector<8x256xf32>
    %c2_62 = arith.constant 2 : index
    %c6_63 = arith.constant 6 : index
    %109 = memref.load %arg2[%c2_62, %c6_63] : memref<6x8xf32, #tpu.memory_space<smem>>
    %110 = vector.broadcast %109 : f32 to vector<8x256xf32>
    %111 = arith.mulf %13, %110 : vector<8x256xf32>
    %112 = arith.addf %108, %111 : vector<8x256xf32>
    %c2_64 = arith.constant 2 : index
    %c7_65 = arith.constant 7 : index
    %113 = memref.load %arg2[%c2_64, %c7_65] : memref<6x8xf32, #tpu.memory_space<smem>>
    %114 = vector.broadcast %113 : f32 to vector<8x256xf32>
    %115 = arith.mulf %15, %114 : vector<8x256xf32>
    %116 = arith.addf %112, %115 : vector<8x256xf32>
    %c2_66 = arith.constant 2 : index
    %117 = memref.load %arg3[%c2_66] : memref<6xf32, #tpu.memory_space<smem>>
    %118 = vector.broadcast %117 : f32 to vector<8x256xf32>
    %119 = arith.addf %116, %118 : vector<8x256xf32>
    %120 = math.tanh %119 : vector<8x256xf32>
    %c3_67 = arith.constant 3 : index
    %c0_68 = arith.constant 0 : index
    %121 = memref.load %arg2[%c3_67, %c0_68] : memref<6x8xf32, #tpu.memory_space<smem>>
    %122 = vector.broadcast %121 : f32 to vector<8x256xf32>
    %123 = arith.mulf %1, %122 : vector<8x256xf32>
    %c3_69 = arith.constant 3 : index
    %c1_70 = arith.constant 1 : index
    %124 = memref.load %arg2[%c3_69, %c1_70] : memref<6x8xf32, #tpu.memory_space<smem>>
    %125 = vector.broadcast %124 : f32 to vector<8x256xf32>
    %126 = arith.mulf %3, %125 : vector<8x256xf32>
    %127 = arith.addf %123, %126 : vector<8x256xf32>
    %c3_71 = arith.constant 3 : index
    %c2_72 = arith.constant 2 : index
    %128 = memref.load %arg2[%c3_71, %c2_72] : memref<6x8xf32, #tpu.memory_space<smem>>
    %129 = vector.broadcast %128 : f32 to vector<8x256xf32>
    %130 = arith.mulf %5, %129 : vector<8x256xf32>
    %131 = arith.addf %127, %130 : vector<8x256xf32>
    %c3_73 = arith.constant 3 : index
    %c3_74 = arith.constant 3 : index
    %132 = memref.load %arg2[%c3_73, %c3_74] : memref<6x8xf32, #tpu.memory_space<smem>>
    %133 = vector.broadcast %132 : f32 to vector<8x256xf32>
    %134 = arith.mulf %7, %133 : vector<8x256xf32>
    %135 = arith.addf %131, %134 : vector<8x256xf32>
    %c3_75 = arith.constant 3 : index
    %c4_76 = arith.constant 4 : index
    %136 = memref.load %arg2[%c3_75, %c4_76] : memref<6x8xf32, #tpu.memory_space<smem>>
    %137 = vector.broadcast %136 : f32 to vector<8x256xf32>
    %138 = arith.mulf %9, %137 : vector<8x256xf32>
    %139 = arith.addf %135, %138 : vector<8x256xf32>
    %c3_77 = arith.constant 3 : index
    %c5_78 = arith.constant 5 : index
    %140 = memref.load %arg2[%c3_77, %c5_78] : memref<6x8xf32, #tpu.memory_space<smem>>
    %141 = vector.broadcast %140 : f32 to vector<8x256xf32>
    %142 = arith.mulf %11, %141 : vector<8x256xf32>
    %143 = arith.addf %139, %142 : vector<8x256xf32>
    %c3_79 = arith.constant 3 : index
    %c6_80 = arith.constant 6 : index
    %144 = memref.load %arg2[%c3_79, %c6_80] : memref<6x8xf32, #tpu.memory_space<smem>>
    %145 = vector.broadcast %144 : f32 to vector<8x256xf32>
    %146 = arith.mulf %13, %145 : vector<8x256xf32>
    %147 = arith.addf %143, %146 : vector<8x256xf32>
    %c3_81 = arith.constant 3 : index
    %c7_82 = arith.constant 7 : index
    %148 = memref.load %arg2[%c3_81, %c7_82] : memref<6x8xf32, #tpu.memory_space<smem>>
    %149 = vector.broadcast %148 : f32 to vector<8x256xf32>
    %150 = arith.mulf %15, %149 : vector<8x256xf32>
    %151 = arith.addf %147, %150 : vector<8x256xf32>
    %c3_83 = arith.constant 3 : index
    %152 = memref.load %arg3[%c3_83] : memref<6xf32, #tpu.memory_space<smem>>
    %153 = vector.broadcast %152 : f32 to vector<8x256xf32>
    %154 = arith.addf %151, %153 : vector<8x256xf32>
    %155 = math.tanh %154 : vector<8x256xf32>
    %c4_84 = arith.constant 4 : index
    %c0_85 = arith.constant 0 : index
    %156 = memref.load %arg2[%c4_84, %c0_85] : memref<6x8xf32, #tpu.memory_space<smem>>
    %157 = vector.broadcast %156 : f32 to vector<8x256xf32>
    %158 = arith.mulf %1, %157 : vector<8x256xf32>
    %c4_86 = arith.constant 4 : index
    %c1_87 = arith.constant 1 : index
    %159 = memref.load %arg2[%c4_86, %c1_87] : memref<6x8xf32, #tpu.memory_space<smem>>
    %160 = vector.broadcast %159 : f32 to vector<8x256xf32>
    %161 = arith.mulf %3, %160 : vector<8x256xf32>
    %162 = arith.addf %158, %161 : vector<8x256xf32>
    %c4_88 = arith.constant 4 : index
    %c2_89 = arith.constant 2 : index
    %163 = memref.load %arg2[%c4_88, %c2_89] : memref<6x8xf32, #tpu.memory_space<smem>>
    %164 = vector.broadcast %163 : f32 to vector<8x256xf32>
    %165 = arith.mulf %5, %164 : vector<8x256xf32>
    %166 = arith.addf %162, %165 : vector<8x256xf32>
    %c4_90 = arith.constant 4 : index
    %c3_91 = arith.constant 3 : index
    %167 = memref.load %arg2[%c4_90, %c3_91] : memref<6x8xf32, #tpu.memory_space<smem>>
    %168 = vector.broadcast %167 : f32 to vector<8x256xf32>
    %169 = arith.mulf %7, %168 : vector<8x256xf32>
    %170 = arith.addf %166, %169 : vector<8x256xf32>
    %c4_92 = arith.constant 4 : index
    %c4_93 = arith.constant 4 : index
    %171 = memref.load %arg2[%c4_92, %c4_93] : memref<6x8xf32, #tpu.memory_space<smem>>
    %172 = vector.broadcast %171 : f32 to vector<8x256xf32>
    %173 = arith.mulf %9, %172 : vector<8x256xf32>
    %174 = arith.addf %170, %173 : vector<8x256xf32>
    %c4_94 = arith.constant 4 : index
    %c5_95 = arith.constant 5 : index
    %175 = memref.load %arg2[%c4_94, %c5_95] : memref<6x8xf32, #tpu.memory_space<smem>>
    %176 = vector.broadcast %175 : f32 to vector<8x256xf32>
    %177 = arith.mulf %11, %176 : vector<8x256xf32>
    %178 = arith.addf %174, %177 : vector<8x256xf32>
    %c4_96 = arith.constant 4 : index
    %c6_97 = arith.constant 6 : index
    %179 = memref.load %arg2[%c4_96, %c6_97] : memref<6x8xf32, #tpu.memory_space<smem>>
    %180 = vector.broadcast %179 : f32 to vector<8x256xf32>
    %181 = arith.mulf %13, %180 : vector<8x256xf32>
    %182 = arith.addf %178, %181 : vector<8x256xf32>
    %c4_98 = arith.constant 4 : index
    %c7_99 = arith.constant 7 : index
    %183 = memref.load %arg2[%c4_98, %c7_99] : memref<6x8xf32, #tpu.memory_space<smem>>
    %184 = vector.broadcast %183 : f32 to vector<8x256xf32>
    %185 = arith.mulf %15, %184 : vector<8x256xf32>
    %186 = arith.addf %182, %185 : vector<8x256xf32>
    %c4_100 = arith.constant 4 : index
    %187 = memref.load %arg3[%c4_100] : memref<6xf32, #tpu.memory_space<smem>>
    %188 = vector.broadcast %187 : f32 to vector<8x256xf32>
    %189 = arith.addf %186, %188 : vector<8x256xf32>
    %190 = math.tanh %189 : vector<8x256xf32>
    %c5_101 = arith.constant 5 : index
    %c0_102 = arith.constant 0 : index
    %191 = memref.load %arg2[%c5_101, %c0_102] : memref<6x8xf32, #tpu.memory_space<smem>>
    %192 = vector.broadcast %191 : f32 to vector<8x256xf32>
    %193 = arith.mulf %1, %192 : vector<8x256xf32>
    %c5_103 = arith.constant 5 : index
    %c1_104 = arith.constant 1 : index
    %194 = memref.load %arg2[%c5_103, %c1_104] : memref<6x8xf32, #tpu.memory_space<smem>>
    %195 = vector.broadcast %194 : f32 to vector<8x256xf32>
    %196 = arith.mulf %3, %195 : vector<8x256xf32>
    %197 = arith.addf %193, %196 : vector<8x256xf32>
    %c5_105 = arith.constant 5 : index
    %c2_106 = arith.constant 2 : index
    %198 = memref.load %arg2[%c5_105, %c2_106] : memref<6x8xf32, #tpu.memory_space<smem>>
    %199 = vector.broadcast %198 : f32 to vector<8x256xf32>
    %200 = arith.mulf %5, %199 : vector<8x256xf32>
    %201 = arith.addf %197, %200 : vector<8x256xf32>
    %c5_107 = arith.constant 5 : index
    %c3_108 = arith.constant 3 : index
    %202 = memref.load %arg2[%c5_107, %c3_108] : memref<6x8xf32, #tpu.memory_space<smem>>
    %203 = vector.broadcast %202 : f32 to vector<8x256xf32>
    %204 = arith.mulf %7, %203 : vector<8x256xf32>
    %205 = arith.addf %201, %204 : vector<8x256xf32>
    %c5_109 = arith.constant 5 : index
    %c4_110 = arith.constant 4 : index
    %206 = memref.load %arg2[%c5_109, %c4_110] : memref<6x8xf32, #tpu.memory_space<smem>>
    %207 = vector.broadcast %206 : f32 to vector<8x256xf32>
    %208 = arith.mulf %9, %207 : vector<8x256xf32>
    %209 = arith.addf %205, %208 : vector<8x256xf32>
    %c5_111 = arith.constant 5 : index
    %c5_112 = arith.constant 5 : index
    %210 = memref.load %arg2[%c5_111, %c5_112] : memref<6x8xf32, #tpu.memory_space<smem>>
    %211 = vector.broadcast %210 : f32 to vector<8x256xf32>
    %212 = arith.mulf %11, %211 : vector<8x256xf32>
    %213 = arith.addf %209, %212 : vector<8x256xf32>
    %c5_113 = arith.constant 5 : index
    %c6_114 = arith.constant 6 : index
    %214 = memref.load %arg2[%c5_113, %c6_114] : memref<6x8xf32, #tpu.memory_space<smem>>
    %215 = vector.broadcast %214 : f32 to vector<8x256xf32>
    %216 = arith.mulf %13, %215 : vector<8x256xf32>
    %217 = arith.addf %213, %216 : vector<8x256xf32>
    %c5_115 = arith.constant 5 : index
    %c7_116 = arith.constant 7 : index
    %218 = memref.load %arg2[%c5_115, %c7_116] : memref<6x8xf32, #tpu.memory_space<smem>>
    %219 = vector.broadcast %218 : f32 to vector<8x256xf32>
    %220 = arith.mulf %15, %219 : vector<8x256xf32>
    %221 = arith.addf %217, %220 : vector<8x256xf32>
    %c5_117 = arith.constant 5 : index
    %222 = memref.load %arg3[%c5_117] : memref<6xf32, #tpu.memory_space<smem>>
    %223 = vector.broadcast %222 : f32 to vector<8x256xf32>
    %224 = arith.addf %221, %223 : vector<8x256xf32>
    %225 = math.tanh %224 : vector<8x256xf32>
    %c0_118 = arith.constant 0 : index
    %c0_119 = arith.constant 0 : index
    %226 = memref.load %arg4[%c0_118, %c0_119] : memref<4x6xf32, #tpu.memory_space<smem>>
    %227 = vector.broadcast %226 : f32 to vector<8x256xf32>
    %228 = arith.mulf %50, %227 : vector<8x256xf32>
    %c0_120 = arith.constant 0 : index
    %c1_121 = arith.constant 1 : index
    %229 = memref.load %arg4[%c0_120, %c1_121] : memref<4x6xf32, #tpu.memory_space<smem>>
    %230 = vector.broadcast %229 : f32 to vector<8x256xf32>
    %231 = arith.mulf %85, %230 : vector<8x256xf32>
    %232 = arith.addf %228, %231 : vector<8x256xf32>
    %c0_122 = arith.constant 0 : index
    %c2_123 = arith.constant 2 : index
    %233 = memref.load %arg4[%c0_122, %c2_123] : memref<4x6xf32, #tpu.memory_space<smem>>
    %234 = vector.broadcast %233 : f32 to vector<8x256xf32>
    %235 = arith.mulf %120, %234 : vector<8x256xf32>
    %236 = arith.addf %232, %235 : vector<8x256xf32>
    %c0_124 = arith.constant 0 : index
    %c3_125 = arith.constant 3 : index
    %237 = memref.load %arg4[%c0_124, %c3_125] : memref<4x6xf32, #tpu.memory_space<smem>>
    %238 = vector.broadcast %237 : f32 to vector<8x256xf32>
    %239 = arith.mulf %155, %238 : vector<8x256xf32>
    %240 = arith.addf %236, %239 : vector<8x256xf32>
    %c0_126 = arith.constant 0 : index
    %c4_127 = arith.constant 4 : index
    %241 = memref.load %arg4[%c0_126, %c4_127] : memref<4x6xf32, #tpu.memory_space<smem>>
    %242 = vector.broadcast %241 : f32 to vector<8x256xf32>
    %243 = arith.mulf %190, %242 : vector<8x256xf32>
    %244 = arith.addf %240, %243 : vector<8x256xf32>
    %c0_128 = arith.constant 0 : index
    %c5_129 = arith.constant 5 : index
    %245 = memref.load %arg4[%c0_128, %c5_129] : memref<4x6xf32, #tpu.memory_space<smem>>
    %246 = vector.broadcast %245 : f32 to vector<8x256xf32>
    %247 = arith.mulf %225, %246 : vector<8x256xf32>
    %248 = arith.addf %244, %247 : vector<8x256xf32>
    %c0_130 = arith.constant 0 : index
    %249 = memref.load %arg5[%c0_130] : memref<4xf32, #tpu.memory_space<smem>>
    %250 = vector.broadcast %249 : f32 to vector<8x256xf32>
    %251 = arith.addf %248, %250 : vector<8x256xf32>
    %252 = math.tanh %251 : vector<8x256xf32>
    %c1_131 = arith.constant 1 : index
    %c0_132 = arith.constant 0 : index
    %253 = memref.load %arg4[%c1_131, %c0_132] : memref<4x6xf32, #tpu.memory_space<smem>>
    %254 = vector.broadcast %253 : f32 to vector<8x256xf32>
    %255 = arith.mulf %50, %254 : vector<8x256xf32>
    %c1_133 = arith.constant 1 : index
    %c1_134 = arith.constant 1 : index
    %256 = memref.load %arg4[%c1_133, %c1_134] : memref<4x6xf32, #tpu.memory_space<smem>>
    %257 = vector.broadcast %256 : f32 to vector<8x256xf32>
    %258 = arith.mulf %85, %257 : vector<8x256xf32>
    %259 = arith.addf %255, %258 : vector<8x256xf32>
    %c1_135 = arith.constant 1 : index
    %c2_136 = arith.constant 2 : index
    %260 = memref.load %arg4[%c1_135, %c2_136] : memref<4x6xf32, #tpu.memory_space<smem>>
    %261 = vector.broadcast %260 : f32 to vector<8x256xf32>
    %262 = arith.mulf %120, %261 : vector<8x256xf32>
    %263 = arith.addf %259, %262 : vector<8x256xf32>
    %c1_137 = arith.constant 1 : index
    %c3_138 = arith.constant 3 : index
    %264 = memref.load %arg4[%c1_137, %c3_138] : memref<4x6xf32, #tpu.memory_space<smem>>
    %265 = vector.broadcast %264 : f32 to vector<8x256xf32>
    %266 = arith.mulf %155, %265 : vector<8x256xf32>
    %267 = arith.addf %263, %266 : vector<8x256xf32>
    %c1_139 = arith.constant 1 : index
    %c4_140 = arith.constant 4 : index
    %268 = memref.load %arg4[%c1_139, %c4_140] : memref<4x6xf32, #tpu.memory_space<smem>>
    %269 = vector.broadcast %268 : f32 to vector<8x256xf32>
    %270 = arith.mulf %190, %269 : vector<8x256xf32>
    %271 = arith.addf %267, %270 : vector<8x256xf32>
    %c1_141 = arith.constant 1 : index
    %c5_142 = arith.constant 5 : index
    %272 = memref.load %arg4[%c1_141, %c5_142] : memref<4x6xf32, #tpu.memory_space<smem>>
    %273 = vector.broadcast %272 : f32 to vector<8x256xf32>
    %274 = arith.mulf %225, %273 : vector<8x256xf32>
    %275 = arith.addf %271, %274 : vector<8x256xf32>
    %c1_143 = arith.constant 1 : index
    %276 = memref.load %arg5[%c1_143] : memref<4xf32, #tpu.memory_space<smem>>
    %277 = vector.broadcast %276 : f32 to vector<8x256xf32>
    %278 = arith.addf %275, %277 : vector<8x256xf32>
    %279 = math.tanh %278 : vector<8x256xf32>
    %c2_144 = arith.constant 2 : index
    %c0_145 = arith.constant 0 : index
    %280 = memref.load %arg4[%c2_144, %c0_145] : memref<4x6xf32, #tpu.memory_space<smem>>
    %281 = vector.broadcast %280 : f32 to vector<8x256xf32>
    %282 = arith.mulf %50, %281 : vector<8x256xf32>
    %c2_146 = arith.constant 2 : index
    %c1_147 = arith.constant 1 : index
    %283 = memref.load %arg4[%c2_146, %c1_147] : memref<4x6xf32, #tpu.memory_space<smem>>
    %284 = vector.broadcast %283 : f32 to vector<8x256xf32>
    %285 = arith.mulf %85, %284 : vector<8x256xf32>
    %286 = arith.addf %282, %285 : vector<8x256xf32>
    %c2_148 = arith.constant 2 : index
    %c2_149 = arith.constant 2 : index
    %287 = memref.load %arg4[%c2_148, %c2_149] : memref<4x6xf32, #tpu.memory_space<smem>>
    %288 = vector.broadcast %287 : f32 to vector<8x256xf32>
    %289 = arith.mulf %120, %288 : vector<8x256xf32>
    %290 = arith.addf %286, %289 : vector<8x256xf32>
    %c2_150 = arith.constant 2 : index
    %c3_151 = arith.constant 3 : index
    %291 = memref.load %arg4[%c2_150, %c3_151] : memref<4x6xf32, #tpu.memory_space<smem>>
    %292 = vector.broadcast %291 : f32 to vector<8x256xf32>
    %293 = arith.mulf %155, %292 : vector<8x256xf32>
    %294 = arith.addf %290, %293 : vector<8x256xf32>
    %c2_152 = arith.constant 2 : index
    %c4_153 = arith.constant 4 : index
    %295 = memref.load %arg4[%c2_152, %c4_153] : memref<4x6xf32, #tpu.memory_space<smem>>
    %296 = vector.broadcast %295 : f32 to vector<8x256xf32>
    %297 = arith.mulf %190, %296 : vector<8x256xf32>
    %298 = arith.addf %294, %297 : vector<8x256xf32>
    %c2_154 = arith.constant 2 : index
    %c5_155 = arith.constant 5 : index
    %299 = memref.load %arg4[%c2_154, %c5_155] : memref<4x6xf32, #tpu.memory_space<smem>>
    %300 = vector.broadcast %299 : f32 to vector<8x256xf32>
    %301 = arith.mulf %225, %300 : vector<8x256xf32>
    %302 = arith.addf %298, %301 : vector<8x256xf32>
    %c2_156 = arith.constant 2 : index
    %303 = memref.load %arg5[%c2_156] : memref<4xf32, #tpu.memory_space<smem>>
    %304 = vector.broadcast %303 : f32 to vector<8x256xf32>
    %305 = arith.addf %302, %304 : vector<8x256xf32>
    %306 = math.tanh %305 : vector<8x256xf32>
    %c3_157 = arith.constant 3 : index
    %c0_158 = arith.constant 0 : index
    %307 = memref.load %arg4[%c3_157, %c0_158] : memref<4x6xf32, #tpu.memory_space<smem>>
    %308 = vector.broadcast %307 : f32 to vector<8x256xf32>
    %309 = arith.mulf %50, %308 : vector<8x256xf32>
    %c3_159 = arith.constant 3 : index
    %c1_160 = arith.constant 1 : index
    %310 = memref.load %arg4[%c3_159, %c1_160] : memref<4x6xf32, #tpu.memory_space<smem>>
    %311 = vector.broadcast %310 : f32 to vector<8x256xf32>
    %312 = arith.mulf %85, %311 : vector<8x256xf32>
    %313 = arith.addf %309, %312 : vector<8x256xf32>
    %c3_161 = arith.constant 3 : index
    %c2_162 = arith.constant 2 : index
    %314 = memref.load %arg4[%c3_161, %c2_162] : memref<4x6xf32, #tpu.memory_space<smem>>
    %315 = vector.broadcast %314 : f32 to vector<8x256xf32>
    %316 = arith.mulf %120, %315 : vector<8x256xf32>
    %317 = arith.addf %313, %316 : vector<8x256xf32>
    %c3_163 = arith.constant 3 : index
    %c3_164 = arith.constant 3 : index
    %318 = memref.load %arg4[%c3_163, %c3_164] : memref<4x6xf32, #tpu.memory_space<smem>>
    %319 = vector.broadcast %318 : f32 to vector<8x256xf32>
    %320 = arith.mulf %155, %319 : vector<8x256xf32>
    %321 = arith.addf %317, %320 : vector<8x256xf32>
    %c3_165 = arith.constant 3 : index
    %c4_166 = arith.constant 4 : index
    %322 = memref.load %arg4[%c3_165, %c4_166] : memref<4x6xf32, #tpu.memory_space<smem>>
    %323 = vector.broadcast %322 : f32 to vector<8x256xf32>
    %324 = arith.mulf %190, %323 : vector<8x256xf32>
    %325 = arith.addf %321, %324 : vector<8x256xf32>
    %c3_167 = arith.constant 3 : index
    %c5_168 = arith.constant 5 : index
    %326 = memref.load %arg4[%c3_167, %c5_168] : memref<4x6xf32, #tpu.memory_space<smem>>
    %327 = vector.broadcast %326 : f32 to vector<8x256xf32>
    %328 = arith.mulf %225, %327 : vector<8x256xf32>
    %329 = arith.addf %325, %328 : vector<8x256xf32>
    %c3_169 = arith.constant 3 : index
    %330 = memref.load %arg5[%c3_169] : memref<4xf32, #tpu.memory_space<smem>>
    %331 = vector.broadcast %330 : f32 to vector<8x256xf32>
    %332 = arith.addf %329, %331 : vector<8x256xf32>
    %333 = math.tanh %332 : vector<8x256xf32>
    %c0_170 = arith.constant 0 : index
    %c0_171 = arith.constant 0 : index
    %334 = memref.load %arg6[%c0_170, %c0_171] : memref<2x4xf32, #tpu.memory_space<smem>>
    %335 = vector.broadcast %334 : f32 to vector<8x256xf32>
    %336 = arith.mulf %252, %335 : vector<8x256xf32>
    %c0_172 = arith.constant 0 : index
    %c1_173 = arith.constant 1 : index
    %337 = memref.load %arg6[%c0_172, %c1_173] : memref<2x4xf32, #tpu.memory_space<smem>>
    %338 = vector.broadcast %337 : f32 to vector<8x256xf32>
    %339 = arith.mulf %279, %338 : vector<8x256xf32>
    %340 = arith.addf %336, %339 : vector<8x256xf32>
    %c0_174 = arith.constant 0 : index
    %c2_175 = arith.constant 2 : index
    %341 = memref.load %arg6[%c0_174, %c2_175] : memref<2x4xf32, #tpu.memory_space<smem>>
    %342 = vector.broadcast %341 : f32 to vector<8x256xf32>
    %343 = arith.mulf %306, %342 : vector<8x256xf32>
    %344 = arith.addf %340, %343 : vector<8x256xf32>
    %c0_176 = arith.constant 0 : index
    %c3_177 = arith.constant 3 : index
    %345 = memref.load %arg6[%c0_176, %c3_177] : memref<2x4xf32, #tpu.memory_space<smem>>
    %346 = vector.broadcast %345 : f32 to vector<8x256xf32>
    %347 = arith.mulf %333, %346 : vector<8x256xf32>
    %348 = arith.addf %344, %347 : vector<8x256xf32>
    %c0_178 = arith.constant 0 : index
    %349 = memref.load %arg7[%c0_178] : memref<2xf32, #tpu.memory_space<smem>>
    %350 = vector.broadcast %349 : f32 to vector<8x256xf32>
    %351 = arith.addf %348, %350 : vector<8x256xf32>
    %352 = math.tanh %351 : vector<8x256xf32>
    %c1_179 = arith.constant 1 : index
    %c0_180 = arith.constant 0 : index
    %353 = memref.load %arg6[%c1_179, %c0_180] : memref<2x4xf32, #tpu.memory_space<smem>>
    %354 = vector.broadcast %353 : f32 to vector<8x256xf32>
    %355 = arith.mulf %252, %354 : vector<8x256xf32>
    %c1_181 = arith.constant 1 : index
    %c1_182 = arith.constant 1 : index
    %356 = memref.load %arg6[%c1_181, %c1_182] : memref<2x4xf32, #tpu.memory_space<smem>>
    %357 = vector.broadcast %356 : f32 to vector<8x256xf32>
    %358 = arith.mulf %279, %357 : vector<8x256xf32>
    %359 = arith.addf %355, %358 : vector<8x256xf32>
    %c1_183 = arith.constant 1 : index
    %c2_184 = arith.constant 2 : index
    %360 = memref.load %arg6[%c1_183, %c2_184] : memref<2x4xf32, #tpu.memory_space<smem>>
    %361 = vector.broadcast %360 : f32 to vector<8x256xf32>
    %362 = arith.mulf %306, %361 : vector<8x256xf32>
    %363 = arith.addf %359, %362 : vector<8x256xf32>
    %c1_185 = arith.constant 1 : index
    %c3_186 = arith.constant 3 : index
    %364 = memref.load %arg6[%c1_185, %c3_186] : memref<2x4xf32, #tpu.memory_space<smem>>
    %365 = vector.broadcast %364 : f32 to vector<8x256xf32>
    %366 = arith.mulf %333, %365 : vector<8x256xf32>
    %367 = arith.addf %363, %366 : vector<8x256xf32>
    %c1_187 = arith.constant 1 : index
    %368 = memref.load %arg7[%c1_187] : memref<2xf32, #tpu.memory_space<smem>>
    %369 = vector.broadcast %368 : f32 to vector<8x256xf32>
    %370 = arith.addf %367, %369 : vector<8x256xf32>
    %371 = math.tanh %370 : vector<8x256xf32>
    %c0_188 = arith.constant 0 : index
    %c0_189 = arith.constant 0 : index
    %372 = memref.load %arg8[%c0_188, %c0_189] : memref<1x2xf32, #tpu.memory_space<smem>>
    %373 = vector.broadcast %372 : f32 to vector<8x256xf32>
    %374 = arith.mulf %352, %373 : vector<8x256xf32>
    %c0_190 = arith.constant 0 : index
    %c1_191 = arith.constant 1 : index
    %375 = memref.load %arg8[%c0_190, %c1_191] : memref<1x2xf32, #tpu.memory_space<smem>>
    %376 = vector.broadcast %375 : f32 to vector<8x256xf32>
    %377 = arith.mulf %371, %376 : vector<8x256xf32>
    %378 = arith.addf %374, %377 : vector<8x256xf32>
    %c0_192 = arith.constant 0 : index
    %379 = memref.load %arg9[%c0_192] : memref<1xf32, #tpu.memory_space<smem>>
    %380 = vector.broadcast %379 : f32 to vector<8x256xf32>
    %381 = arith.addf %378, %380 : vector<8x256xf32>
    %382 = math.tanh %381 : vector<8x256xf32>
    %cst = arith.constant 1.000000e+00 : f32
    %383 = vector.broadcast %cst : f32 to vector<8x256xf32>
    %384 = arith.addf %382, %383 : vector<8x256xf32>
    %cst_193 = arith.constant 5.000000e-01 : f32
    %385 = vector.broadcast %cst_193 : f32 to vector<8x256xf32>
    %386 = arith.mulf %385, %384 : vector<8x256xf32>
    %c0_194 = arith.constant 0 : index
    %c0_195 = arith.constant 0 : index
    %387 = vector.load %arg10[%c0_194, %c0_195] : memref<8x256xf32, #tpu.memory_space<vmem>>, vector<8x256xf32>
    tpu.vector_store %arg10[%c0_194, %c0_195], %386 {strides = array<i32>} : memref<8x256xf32, #tpu.memory_space<vmem>>, vector<8x256xf32>,
    return
  }
  func.func @transform_0(%arg0: i32) -> (i32, i32, i32) {
    %c0_i32 = arith.constant 0 : i32
    %c0_i32_0 = arith.constant 0 : i32
    %c0_i32_1 = arith.constant 0 : i32
    return %c0_i32, %arg0, %c0_i32_0 : i32, i32, i32
  }
  func.func @transform_1(%arg0: i32) -> (i32, i32) {
    %c0_i32 = arith.constant 0 : i32
    %c0_i32_0 = arith.constant 0 : i32
    %c0_i32_1 = arith.constant 0 : i32
    return %c0_i32, %c0_i32_0 : i32, i32
  }
  func.func @transform_2(%arg0: i32) -> i32 {
    %c0_i32 = arith.constant 0 : i32
    %c0_i32_0 = arith.constant 0 : i32
    return %c0_i32 : i32
  }
  func.func @transform_3(%arg0: i32) -> (i32, i32) {
    %c0_i32 = arith.constant 0 : i32
    %c0_i32_0 = arith.constant 0 : i32
    %c0_i32_1 = arith.constant 0 : i32
    return %c0_i32, %c0_i32_0 : i32, i32
  }
  func.func @transform_4(%arg0: i32) -> i32 {
    %c0_i32 = arith.constant 0 : i32
    %c0_i32_0 = arith.constant 0 : i32
    return %c0_i32 : i32
  }
  func.func @transform_5(%arg0: i32) -> (i32, i32) {
    %c0_i32 = arith.constant 0 : i32
    %c0_i32_0 = arith.constant 0 : i32
    %c0_i32_1 = arith.constant 0 : i32
    return %c0_i32, %c0_i32_0 : i32, i32
  }
  func.func @transform_6(%arg0: i32) -> i32 {
    %c0_i32 = arith.constant 0 : i32
    %c0_i32_0 = arith.constant 0 : i32
    return %c0_i32 : i32
  }
  func.func @transform_7(%arg0: i32) -> (i32, i32) {
    %c0_i32 = arith.constant 0 : i32
    %c0_i32_0 = arith.constant 0 : i32
    %c0_i32_1 = arith.constant 0 : i32
    return %c0_i32, %c0_i32_0 : i32, i32
  }
  func.func @transform_8(%arg0: i32) -> i32 {
    %c0_i32 = arith.constant 0 : i32
    %c0_i32_0 = arith.constant 0 : i32
    return %c0_i32 : i32
  }
  func.func @transform_9(%arg0: i32) -> (i32, i32) {
    %c0_i32 = arith.constant 0 : i32
    %c0_i32_0 = arith.constant 0 : i32
    return %arg0, %c0_i32 : i32, i32
  }
}

</mosaic_0001>

<llo_original>
// kernel: tpu_custom_call.1
$region0: #{tpu_custom_call.1}
  #allocation0 [shape = 'u32[]', space=smem, size = 0x4, offset = 0x4, fixed_abs, tag = 'smem constant byte address 0x4 - core index']
  #allocation1 [shape = 'u32[144,128]{1,0:T(1,128)}', space=vmem, size = 0x12000, scoped, tag = 'internal scratch']
  #allocation2 [shape = 'f32[1]{0:T(128)S(6)}', space=smem, size = 0x200, scoped, tag = 'scoped memory for tpu_custom_call.1']
  %s0 = inlined_call_operand.hbm [shape: f32[8,8,256], index: 0, kind: input, shape index: {}]
  %s1 = inlined_call_operand.hbm [shape: f32[6,8], index: 1, kind: input, shape index: {}]
  %s2 = inlined_call_operand.vmem [shape: f32[6], index: 2, kind: input, shape index: {}]
  %s3 = inlined_call_operand.vmem [shape: f32[4,6], index: 3, kind: input, shape index: {}]
  %s4 = inlined_call_operand.vmem [shape: f32[4], index: 4, kind: input, shape index: {}]
  %s5 = inlined_call_operand.vmem [shape: f32[2,4], index: 5, kind: input, shape index: {}]
  %s6 = inlined_call_operand.vmem [shape: f32[2], index: 6, kind: input, shape index: {}]
  %s7 = inlined_call_operand.vmem [shape: f32[1,2], index: 7, kind: input, shape index: {}]
  %s8 = inlined_call_operand.<no memory space> [shape: f32[1], index: 8, kind: input, shape index: {}]
  %s9 = inlined_call_operand.hbm [shape: f32[8,256], index: 9, kind: output, shape index: {}]
  %s10 = sld [smem:[#allocation0]]
  $region78: #{tpu_custom_call.1} parent=0
    _
  %s12 = ssub.s32 1, %s10
  %s13 = scalar_select 0, %s12, %s10
  %14 = sst [smem:[#allocation2]] %s8
  $region1: #{tpu_custom_call.1} parent=0
    #allocation3 [shape = 'u8[65536]{0}', space=vmem, size = 0x10000, scoped, tag = 'input window, operand 0, single buffered']
    #allocation4 [shape = 's32[1]{0}', space=sflag, size = 0x4, scoped, tag = 'scoped memory for tpu_custom_call.1']
    #allocation5 [shape = 's32[1]{0}', space=sflag, size = 0x4, scoped, tag = 'scoped memory for tpu_custom_call.1']
    #allocation6 [shape = 's32[1]{0}', space=sflag, size = 0x4, scoped, tag = 'scoped memory for tpu_custom_call.1']
    #allocation7 [shape = 's32[1]{0}', space=sflag, size = 0x4, scoped, tag = 'scoped memory for tpu_custom_call.1']
    #allocation8 [shape = 'u8[4096]{0}', space=smem, size = 0x1000, scoped, tag = 'input window, operand 1, single buffered']
    #allocation9 [shape = 'u8[512]{0}', space=smem, size = 0x200, scoped, tag = 'input window, operand 2, single buffered']
    #allocation10 [shape = 'u8[2048]{0}', space=smem, size = 0x800, scoped, tag = 'input window, operand 3, single buffered']
    #allocation11 [shape = 's32[1]{0}', space=sflag, size = 0x4, scoped, tag = 'scoped memory for tpu_custom_call.1']
    #allocation12 [shape = 'u8[512]{0}', space=smem, size = 0x200, scoped, tag = 'input window, operand 4, single buffered']
    #allocation13 [shape = 'u8[1024]{0}', space=smem, size = 0x400, scoped, tag = 'input window, operand 5, single buffered']
    #allocation14 [shape = 's32[1]{0}', space=sflag, size = 0x4, scoped, tag = 'scoped memory for tpu_custom_call.1']
    #allocation15 [shape = 'u8[512]{0}', space=smem, size = 0x200, scoped, tag = 'input window, operand 6, single buffered']
    #allocation16 [shape = 'u8[512]{0}', space=smem, size = 0x200, scoped, tag = 'input window, operand 7, single buffered']
    #allocation17 [shape = 's32[1]{0}', space=sflag, size = 0x4, scoped, tag = 'scoped memory for tpu_custom_call.1']
    #allocation18 [shape = 'u8[8192]{0}', space=vmem, size = 0x2000, scoped, tag = 'output window, operand 0, single buffered']
    %15 = vsyncpa [#allocation4], 0
    %16 = vsyncpa [#allocation6], 0
    %17 = vsyncpa [#allocation7], 0
    %18 = vsyncpa [#allocation11], 0
    %19 = vsyncpa [#allocation14], 0
    %20 = vsyncpa [#allocation17], 0
    %21 = vsyncpa [#allocation5], 0
    // Predicated region
    $region2: #{tpu_custom_call.1} parent=1 // pred_check
      _
    $region3: #{tpu_custom_call.1} parent=1 // pred_check_branch
      %23 = sbr.rel (0) target = $region5
    $region4: #{tpu_custom_call.1} parent=1 // pred_region
      %s25 = ssub.s32 2048, 2048
      %26 = vsyncadd [#allocation4], %s25
      %s27 = sshll.u32 [#allocation3], 4
      %s28 = int_to_ptr.vmem [resolvable:$true] %s27
      %33 = dma.hbm_to_vmem [thread:$0]  %s0, 2048, %s28, [#allocation4], 256, 256, 16
    $region5: #{tpu_custom_call.1} parent=1 // pred_fallthru
      _
    // Predicated region
    $region6: #{tpu_custom_call.1} parent=1 // pred_check
      _
    $region7: #{tpu_custom_call.1} parent=1 // pred_check_branch
      %35 = sbr.rel (0) target = $region9
    $region8: #{tpu_custom_call.1} parent=1 // pred_region
      %s37 = ssub.s32 128, 128
      %38 = vsyncadd [#allocation6], %s37
      %41 = dma.hbm_to_smem %s1, 128, [#allocation8], [#allocation6]
    $region9: #{tpu_custom_call.1} parent=1 // pred_fallthru
      _
    // Predicated region
    $region10: #{tpu_custom_call.1} parent=1 // pred_check
      _
    $region11: #{tpu_custom_call.1} parent=1 // pred_check_branch
      %43 = sbr.rel (0) target = $region13
    $region12: #{tpu_custom_call.1} parent=1 // pred_region
      %s45 = ssub.s32 16, 16
      %46 = vsyncadd [#allocation7], %s45
      %s48 = sshll.u32 %s2, 4
      %s49 = int_to_ptr.vmem [resolvable:$true] %s48
      %51 = dma.vmem_to_smem %s49, 16, [#allocation9], [#allocation7]
    $region13: #{tpu_custom_call.1} parent=1 // pred_fallthru
      _
    // Predicated region
    $region14: #{tpu_custom_call.1} parent=1 // pred_check
      _
    $region15: #{tpu_custom_call.1} parent=1 // pred_check_branch
      %53 = sbr.rel (0) target = $region17
    $region16: #{tpu_custom_call.1} parent=1 // pred_region
      %s55 = ssub.s32 64, 64
      %56 = vsyncadd [#allocation11], %s55
      %s58 = sshll.u32 %s3, 4
      %s59 = int_to_ptr.vmem [resolvable:$true] %s58
      %61 = dma.vmem_to_smem %s59, 64, [#allocation10], [#allocation11]
    $region17: #{tpu_custom_call.1} parent=1 // pred_fallthru
      _
    // Predicated region
    $region18: #{tpu_custom_call.1} parent=1 // pred_check
      _
    $region19: #{tpu_custom_call.1} parent=1 // pred_check_branch
      %63 = sbr.rel (0) target = $region21
    $region20: #{tpu_custom_call.1} parent=1 // pred_region
      %s65 = ssub.s32 16, 16
      %66 = vsyncadd [#allocation11], %s65
      %s68 = sshll.u32 %s4, 4
      %s69 = int_to_ptr.vmem [resolvable:$true] %s68
      %71 = dma.vmem_to_smem %s69, 16, [#allocation12], [#allocation11]
    $region21: #{tpu_custom_call.1} parent=1 // pred_fallthru
      _
    // Predicated region
    $region22: #{tpu_custom_call.1} parent=1 // pred_check
      _
    $region23: #{tpu_custom_call.1} parent=1 // pred_check_branch
      %73 = sbr.rel (0) target = $region25
    $region24: #{tpu_custom_call.1} parent=1 // pred_region
      %s75 = ssub.s32 32, 32
      %76 = vsyncadd [#allocation14], %s75
      %s78 = sshll.u32 %s5, 4
      %s79 = int_to_ptr.vmem [resolvable:$true] %s78
      %81 = dma.vmem_to_smem %s79, 32, [#allocation13], [#allocation14]
    $region25: #{tpu_custom_call.1} parent=1 // pred_fallthru
      _
    // Predicated region
    $region26: #{tpu_custom_call.1} parent=1 // pred_check
      _
    $region27: #{tpu_custom_call.1} parent=1 // pred_check_branch
      %83 = sbr.rel (0) target = $region29
    $region28: #{tpu_custom_call.1} parent=1 // pred_region
      %s85 = ssub.s32 16, 16
      %86 = vsyncadd [#allocation14], %s85
      %s88 = sshll.u32 %s6, 4
      %s89 = int_to_ptr.vmem [resolvable:$true] %s88
      %91 = dma.vmem_to_smem %s89, 16, [#allocation15], [#allocation14]
    $region29: #{tpu_custom_call.1} parent=1 // pred_fallthru
      _
    // Predicated region
    $region30: #{tpu_custom_call.1} parent=1 // pred_check
      _
    $region31: #{tpu_custom_call.1} parent=1 // pred_check_branch
      %93 = sbr.rel (0) target = $region33
    $region32: #{tpu_custom_call.1} parent=1 // pred_region
      %s95 = ssub.s32 16, 16
      %96 = vsyncadd [#allocation17], %s95
      %s98 = sshll.u32 %s7, 4
      %s99 = int_to_ptr.vmem [resolvable:$true] %s98
      %101 = dma.vmem_to_smem %s99, 16, [#allocation16], [#allocation17]
    $region33: #{tpu_custom_call.1} parent=1 // pred_fallthru
      _
    // Predicated region
    $region34: #{tpu_custom_call.1} parent=1 // pred_check
      _
    $region35: #{tpu_custom_call.1} parent=1 // pred_check_branch
      %103 = sbr.rel (0) target = $region37
    $region36: #{tpu_custom_call.1} parent=1 // pred_region
      _
    $region37: #{tpu_custom_call.1} parent=1 // pred_fallthru
      _
    // Predicated region
    $region38: #{tpu_custom_call.1} parent=1 // pred_check
      _
    $region39: #{tpu_custom_call.1} parent=1 // pred_check_branch
      %105 = sbr.rel (0) target = $region41
    $region40: #{tpu_custom_call.1} parent=1 // pred_region
      %106 = dma.done [#allocation4], 2048
    $region41: #{tpu_custom_call.1} parent=1 // pred_fallthru
      _
    // Predicated region
    $region42: #{tpu_custom_call.1} parent=1 // pred_check
      _
    $region43: #{tpu_custom_call.1} parent=1 // pred_check_branch
      %108 = sbr.rel (0) target = $region45
    $region44: #{tpu_custom_call.1} parent=1 // pred_region
      %109 = dma.done [#allocation6], 128
    $region45: #{tpu_custom_call.1} parent=1 // pred_fallthru
      _
    // Predicated region
    $region46: #{tpu_custom_call.1} parent=1 // pred_check
      _
    $region47: #{tpu_custom_call.1} parent=1 // pred_check_branch
      %111 = sbr.rel (0) target = $region49
    $region48: #{tpu_custom_call.1} parent=1 // pred_region
      %112 = dma.done [#allocation7], 16
    $region49: #{tpu_custom_call.1} parent=1 // pred_fallthru
      _
    // Predicated region
    $region50: #{tpu_custom_call.1} parent=1 // pred_check
      _
    $region51: #{tpu_custom_call.1} parent=1 // pred_check_branch
      %114 = sbr.rel (0) target = $region53
    $region52: #{tpu_custom_call.1} parent=1 // pred_region
      %115 = dma.done [#allocation11], 64
    $region53: #{tpu_custom_call.1} parent=1 // pred_fallthru
      _
    // Predicated region
    $region54: #{tpu_custom_call.1} parent=1 // pred_check
      _
    $region55: #{tpu_custom_call.1} parent=1 // pred_check_branch
      %117 = sbr.rel (0) target = $region57
    $region56: #{tpu_custom_call.1} parent=1 // pred_region
      %118 = dma.done [#allocation11], 16
    $region57: #{tpu_custom_call.1} parent=1 // pred_fallthru
      _
    // Predicated region
    $region58: #{tpu_custom_call.1} parent=1 // pred_check
      _
    $region59: #{tpu_custom_call.1} parent=1 // pred_check_branch
      %120 = sbr.rel (0) target = $region61
    $region60: #{tpu_custom_call.1} parent=1 // pred_region
      %121 = dma.done [#allocation14], 32
    $region61: #{tpu_custom_call.1} parent=1 // pred_fallthru
      _
    // Predicated region
    $region62: #{tpu_custom_call.1} parent=1 // pred_check
      _
    $region63: #{tpu_custom_call.1} parent=1 // pred_check_branch
      %123 = sbr.rel (0) target = $region65
    $region64: #{tpu_custom_call.1} parent=1 // pred_region
      %124 = dma.done [#allocation14], 16
    $region65: #{tpu_custom_call.1} parent=1 // pred_fallthru
      _
    // Predicated region
    $region66: #{tpu_custom_call.1} parent=1 // pred_check
      _
    $region67: #{tpu_custom_call.1} parent=1 // pred_check_branch
      %126 = sbr.rel (0) target = $region69
    $region68: #{tpu_custom_call.1} parent=1 // pred_region
      %127 = dma.done [#allocation17], 16
    $region69: #{tpu_custom_call.1} parent=1 // pred_fallthru
      _
    %128 = sfence
    %v129 = vld [vmem:[#allocation3] sm:$0xff]
    %v130 = vld [vmem:[#allocation3 + $0x8] sm:$0xff]
    %s131 = scalar_lea.vmem [#allocation3], 16
    %v132 = vld [vmem:[%s131] sm:$0xff]
    %v133 = vld [vmem:[%s131 + $0x8] sm:$0xff]
    %s134 = scalar_lea.vmem [#allocation3], 32
    %v135 = vld [vmem:[%s134] sm:$0xff]
    %v136 = vld [vmem:[%s134 + $0x8] sm:$0xff]
    %s137 = scalar_lea.vmem [#allocation3], 48
    %v138 = vld [vmem:[%s137] sm:$0xff]
    %v139 = vld [vmem:[%s137 + $0x8] sm:$0xff]
    %s140 = scalar_lea.vmem [#allocation3], 64
    %v141 = vld [vmem:[%s140] sm:$0xff]
    %v142 = vld [vmem:[%s140 + $0x8] sm:$0xff]
    %s143 = scalar_lea.vmem [#allocation3], 80
    %v144 = vld [vmem:[%s143] sm:$0xff]
    %v145 = vld [vmem:[%s143 + $0x8] sm:$0xff]
    %s146 = scalar_lea.vmem [#allocation3], 96
    %v147 = vld [vmem:[%s146] sm:$0xff]
    %v148 = vld [vmem:[%s146 + $0x8] sm:$0xff]
    %s149 = scalar_lea.vmem [#allocation3], 112
    %v150 = vld [vmem:[%s149] sm:$0xff]
    %v151 = vld [vmem:[%s149 + $0x8] sm:$0xff]
    %s152 = sld [smem:[#allocation8]]
    %v153 = vstv %s152
    %v154 = vmul.f32 %v129, %v153
    %v155 = vmul.f32 %v130, %v153
    %s156 = sld [smem:[#allocation8 + $0x1]]
    %v157 = vstv %s156
    %v158 = vmul.f32 %v132, %v157
    %v159 = vmul.f32 %v133, %v157
    %v160 = vadd.f32 %v154, %v158
    %v161 = vadd.f32 %v155, %v159
    %s162 = sld [smem:[#allocation8 + $0x2]]
    %v163 = vstv %s162
    %v164 = vmul.f32 %v135, %v163
    %v165 = vmul.f32 %v136, %v163
    %v166 = vadd.f32 %v160, %v164
    %v167 = vadd.f32 %v161, %v165
    %s168 = sld [smem:[#allocation8 + $0x3]]
    %v169 = vstv %s168
    %v170 = vmul.f32 %v138, %v169
    %v171 = vmul.f32 %v139, %v169
    %v172 = vadd.f32 %v166, %v170
    %v173 = vadd.f32 %v167, %v171
    %s174 = sld [smem:[#allocation8 + $0x4]]
    %v175 = vstv %s174
    %v176 = vmul.f32 %v141, %v175
    %v177 = vmul.f32 %v142, %v175
    %v178 = vadd.f32 %v172, %v176
    %v179 = vadd.f32 %v173, %v177
    %s180 = sld [smem:[#allocation8 + $0x5]]
    %v181 = vstv %s180
    %v182 = vmul.f32 %v144, %v181
    %v183 = vmul.f32 %v145, %v181
    %v184 = vadd.f32 %v178, %v182
    %v185 = vadd.f32 %v179, %v183
    %s186 = sld [smem:[#allocation8 + $0x6]]
    %v187 = vstv %s186
    %v188 = vmul.f32 %v147, %v187
    %v189 = vmul.f32 %v148, %v187
    %v190 = vadd.f32 %v184, %v188
    %v191 = vadd.f32 %v185, %v189
    %s192 = sld [smem:[#allocation8 + $0x7]]
    %v193 = vstv %s192
    %v194 = vmul.f32 %v150, %v193
    %v195 = vmul.f32 %v151, %v193
    %v196 = vadd.f32 %v190, %v194
    %v197 = vadd.f32 %v191, %v195
    %s198 = sld [smem:[#allocation9]]
    %v199 = vstv %s198
    %v200 = vadd.f32 %v196, %v199
    %v201 = vadd.f32 %v197, %v199
    %v202 = vtanh.pop %v200
    %v203 = vtanh.pop %v201
    %s204 = sld [smem:[#allocation8 + $0x80]]
    %v205 = vstv %s204
    %v206 = vmul.f32 %v129, %v205
    %v207 = vmul.f32 %v130, %v205
    %s208 = sld [smem:[#allocation8 + $0x81]]
    %v209 = vstv %s208
    %v210 = vmul.f32 %v132, %v209
    %v211 = vmul.f32 %v133, %v209
    %v212 = vadd.f32 %v206, %v210
    %v213 = vadd.f32 %v207, %v211
    %s214 = sld [smem:[#allocation8 + $0x82]]
    %v215 = vstv %s214
    %v216 = vmul.f32 %v135, %v215
    %v217 = vmul.f32 %v136, %v215
    %v218 = vadd.f32 %v212, %v216
    %v219 = vadd.f32 %v213, %v217
    %s220 = sld [smem:[#allocation8 + $0x83]]
    %v221 = vstv %s220
    %v222 = vmul.f32 %v138, %v221
    %v223 = vmul.f32 %v139, %v221
    %v224 = vadd.f32 %v218, %v222
    %v225 = vadd.f32 %v219, %v223
    %s226 = sld [smem:[#allocation8 + $0x84]]
    %v227 = vstv %s226
    %v228 = vmul.f32 %v141, %v227
    %v229 = vmul.f32 %v142, %v227
    %v230 = vadd.f32 %v224, %v228
    %v231 = vadd.f32 %v225, %v229
    %s232 = sld [smem:[#allocation8 + $0x85]]
    %v233 = vstv %s232
    %v234 = vmul.f32 %v144, %v233
    %v235 = vmul.f32 %v145, %v233
    %v236 = vadd.f32 %v230, %v234
    %v237 = vadd.f32 %v231, %v235
    %s238 = sld [smem:[#allocation8 + $0x86]]
    %v239 = vstv %s238
    %v240 = vmul.f32 %v147, %v239
    %v241 = vmul.f32 %v148, %v239
    %v242 = vadd.f32 %v236, %v240
    %v243 = vadd.f32 %v237, %v241
    %s244 = sld [smem:[#allocation8 + $0x87]]
    %v245 = vstv %s244
    %v246 = vmul.f32 %v150, %v245
    %v247 = vmul.f32 %v151, %v245
    %v248 = vadd.f32 %v242, %v246
    %v249 = vadd.f32 %v243, %v247
    %s250 = sld [smem:[#allocation9 + $0x1]]
    %v251 = vstv %s250
    %v252 = vadd.f32 %v248, %v251
    %v253 = vadd.f32 %v249, %v251
    %v254 = vtanh.pop %v252
    %v255 = vtanh.pop %v253
    %s256 = sld [smem:[#allocation8 + $0x100]]
    %v257 = vstv %s256
    %v258 = vmul.f32 %v129, %v257
    %v259 = vmul.f32 %v130, %v257
    %s260 = sld [smem:[#allocation8 + $0x101]]
    %v261 = vstv %s260
    %v262 = vmul.f32 %v132, %v261
    %v263 = vmul.f32 %v133, %v261
    %v264 = vadd.f32 %v258, %v262
    %v265 = vadd.f32 %v259, %v263
    %s266 = sld [smem:[#allocation8 + $0x102]]
    %v267 = vstv %s266
    %v268 = vmul.f32 %v135, %v267
    %v269 = vmul.f32 %v136, %v267
    %v270 = vadd.f32 %v264, %v268
    %v271 = vadd.f32 %v265, %v269
    %s272 = sld [smem:[#allocation8 + $0x103]]
    %v273 = vstv %s272
    %v274 = vmul.f32 %v138, %v273
    %v275 = vmul.f32 %v139, %v273
    %v276 = vadd.f32 %v270, %v274
    %v277 = vadd.f32 %v271, %v275
    %s278 = sld [smem:[#allocation8 + $0x104]]
    %v279 = vstv %s278
    %v280 = vmul.f32 %v141, %v279
    %v281 = vmul.f32 %v142, %v279
    %v282 = vadd.f32 %v276, %v280
    %v283 = vadd.f32 %v277, %v281
    %s284 = sld [smem:[#allocation8 + $0x105]]
    %v285 = vstv %s284
    %v286 = vmul.f32 %v144, %v285
    %v287 = vmul.f32 %v145, %v285
    %v288 = vadd.f32 %v282, %v286
    %v289 = vadd.f32 %v283, %v287
    %s290 = sld [smem:[#allocation8 + $0x106]]
    %v291 = vstv %s290
    %v292 = vmul.f32 %v147, %v291
    %v293 = vmul.f32 %v148, %v291
    %v294 = vadd.f32 %v288, %v292
    %v295 = vadd.f32 %v289, %v293
    %s296 = sld [smem:[#allocation8 + $0x107]]
    %v297 = vstv %s296
    %v298 = vmul.f32 %v150, %v297
    %v299 = vmul.f32 %v151, %v297
    %v300 = vadd.f32 %v294, %v298
    %v301 = vadd.f32 %v295, %v299
    %s302 = sld [smem:[#allocation9 + $0x2]]
    %v303 = vstv %s302
    %v304 = vadd.f32 %v300, %v303
    %v305 = vadd.f32 %v301, %v303
    %v306 = vtanh.pop %v304
    %v307 = vtanh.pop %v305
    %s308 = sld [smem:[#allocation8 + $0x180]]
    %v309 = vstv %s308
    %v310 = vmul.f32 %v129, %v309
    %v311 = vmul.f32 %v130, %v309
    %s312 = sld [smem:[#allocation8 + $0x181]]
    %v313 = vstv %s312
    %v314 = vmul.f32 %v132, %v313
    %v315 = vmul.f32 %v133, %v313
    %v316 = vadd.f32 %v310, %v314
    %v317 = vadd.f32 %v311, %v315
    %s318 = sld [smem:[#allocation8 + $0x182]]
    %v319 = vstv %s318
    %v320 = vmul.f32 %v135, %v319
    %v321 = vmul.f32 %v136, %v319
    %v322 = vadd.f32 %v316, %v320
    %v323 = vadd.f32 %v317, %v321
    %s324 = sld [smem:[#allocation8 + $0x183]]
    %v325 = vstv %s324
    %v326 = vmul.f32 %v138, %v325
    %v327 = vmul.f32 %v139, %v325
    %v328 = vadd.f32 %v322, %v326
    %v329 = vadd.f32 %v323, %v327
    %s330 = sld [smem:[#allocation8 + $0x184]]
    %v331 = vstv %s330
    %v332 = vmul.f32 %v141, %v331
    %v333 = vmul.f32 %v142, %v331
    %v334 = vadd.f32 %v328, %v332
    %v335 = vadd.f32 %v329, %v333
    %s336 = sld [smem:[#allocation8 + $0x185]]
    %v337 = vstv %s336
    %v338 = vmul.f32 %v144, %v337
    %v339 = vmul.f32 %v145, %v337
    %v340 = vadd.f32 %v334, %v338
    %v341 = vadd.f32 %v335, %v339
    %s342 = sld [smem:[#allocation8 + $0x186]]
    %v343 = vstv %s342
    %v344 = vmul.f32 %v147, %v343
    %v345 = vmul.f32 %v148, %v343
    %v346 = vadd.f32 %v340, %v344
    %v347 = vadd.f32 %v341, %v345
    %s348 = sld [smem:[#allocation8 + $0x187]]
    %v349 = vstv %s348
    %v350 = vmul.f32 %v150, %v349
    %v351 = vmul.f32 %v151, %v349
    %v352 = vadd.f32 %v346, %v350
    %v353 = vadd.f32 %v347, %v351
    %s354 = sld [smem:[#allocation9 + $0x3]]
    %v355 = vstv %s354
    %v356 = vadd.f32 %v352, %v355
    %v357 = vadd.f32 %v353, %v355
    %v358 = vtanh.pop %v356
    %v359 = vtanh.pop %v357
    %s360 = sld [smem:[#allocation8 + $0x200]]
    %v361 = vstv %s360
    %v362 = vmul.f32 %v129, %v361
    %v363 = vmul.f32 %v130, %v361
    %s364 = sld [smem:[#allocation8 + $0x201]]
    %v365 = vstv %s364
    %v366 = vmul.f32 %v132, %v365
    %v367 = vmul.f32 %v133, %v365
    %v368 = vadd.f32 %v362, %v366
    %v369 = vadd.f32 %v363, %v367
    %s370 = sld [smem:[#allocation8 + $0x202]]
    %v371 = vstv %s370
    %v372 = vmul.f32 %v135, %v371
    %v373 = vmul.f32 %v136, %v371
    %v374 = vadd.f32 %v368, %v372
    %v375 = vadd.f32 %v369, %v373
    %s376 = sld [smem:[#allocation8 + $0x203]]
    %v377 = vstv %s376
    %v378 = vmul.f32 %v138, %v377
    %v379 = vmul.f32 %v139, %v377
    %v380 = vadd.f32 %v374, %v378
    %v381 = vadd.f32 %v375, %v379
    %s382 = sld [smem:[#allocation8 + $0x204]]
    %v383 = vstv %s382
    %v384 = vmul.f32 %v141, %v383
    %v385 = vmul.f32 %v142, %v383
    %v386 = vadd.f32 %v380, %v384
    %v387 = vadd.f32 %v381, %v385
    %s388 = sld [smem:[#allocation8 + $0x205]]
    %v389 = vstv %s388
    %v390 = vmul.f32 %v144, %v389
    %v391 = vmul.f32 %v145, %v389
    %v392 = vadd.f32 %v386, %v390
    %v393 = vadd.f32 %v387, %v391
    %s394 = sld [smem:[#allocation8 + $0x206]]
    %v395 = vstv %s394
    %v396 = vmul.f32 %v147, %v395
    %v397 = vmul.f32 %v148, %v395
    %v398 = vadd.f32 %v392, %v396
    %v399 = vadd.f32 %v393, %v397
    %s400 = sld [smem:[#allocation8 + $0x207]]
    %v401 = vstv %s400
    %v402 = vmul.f32 %v150, %v401
    %v403 = vmul.f32 %v151, %v401
    %v404 = vadd.f32 %v398, %v402
    %v405 = vadd.f32 %v399, %v403
    %s406 = sld [smem:[#allocation9 + $0x4]]
    %v407 = vstv %s406
    %v408 = vadd.f32 %v404, %v407
    %v409 = vadd.f32 %v405, %v407
    %v410 = vtanh.pop %v408
    %v411 = vtanh.pop %v409
    %s412 = sld [smem:[#allocation8 + $0x280]]
    %v413 = vstv %s412
    %v414 = vmul.f32 %v129, %v413
    %v415 = vmul.f32 %v130, %v413
    %s416 = sld [smem:[#allocation8 + $0x281]]
    %v417 = vstv %s416
    %v418 = vmul.f32 %v132, %v417
    %v419 = vmul.f32 %v133, %v417
    %v420 = vadd.f32 %v414, %v418
    %v421 = vadd.f32 %v415, %v419
    %s422 = sld [smem:[#allocation8 + $0x282]]
    %v423 = vstv %s422
    %v424 = vmul.f32 %v135, %v423
    %v425 = vmul.f32 %v136, %v423
    %v426 = vadd.f32 %v420, %v424
    %v427 = vadd.f32 %v421, %v425
    %s428 = sld [smem:[#allocation8 + $0x283]]
    %v429 = vstv %s428
    %v430 = vmul.f32 %v138, %v429
    %v431 = vmul.f32 %v139, %v429
    %v432 = vadd.f32 %v426, %v430
    %v433 = vadd.f32 %v427, %v431
    %s434 = sld [smem:[#allocation8 + $0x284]]
    %v435 = vstv %s434
    %v436 = vmul.f32 %v141, %v435
    %v437 = vmul.f32 %v142, %v435
    %v438 = vadd.f32 %v432, %v436
    %v439 = vadd.f32 %v433, %v437
    %s440 = sld [smem:[#allocation8 + $0x285]]
    %v441 = vstv %s440
    %v442 = vmul.f32 %v144, %v441
    %v443 = vmul.f32 %v145, %v441
    %v444 = vadd.f32 %v438, %v442
    %v445 = vadd.f32 %v439, %v443
    %s446 = sld [smem:[#allocation8 + $0x286]]
    %v447 = vstv %s446
    %v448 = vmul.f32 %v147, %v447
    %v449 = vmul.f32 %v148, %v447
    %v450 = vadd.f32 %v444, %v448
    %v451 = vadd.f32 %v445, %v449
    %s452 = sld [smem:[#allocation8 + $0x287]]
    %v453 = vstv %s452
    %v454 = vmul.f32 %v150, %v453
    %v455 = vmul.f32 %v151, %v453
    %v456 = vadd.f32 %v450, %v454
    %v457 = vadd.f32 %v451, %v455
    %s458 = sld [smem:[#allocation9 + $0x5]]
    %v459 = vstv %s458
    %v460 = vadd.f32 %v456, %v459
    %v461 = vadd.f32 %v457, %v459
    %v462 = vtanh.pop %v460
    %v463 = vtanh.pop %v461
    %s464 = sld [smem:[#allocation10]]
    %v465 = vstv %s464
    %v466 = vmul.f32 %v202, %v465
    %v467 = vmul.f32 %v203, %v465
    %s468 = sld [smem:[#allocation10 + $0x1]]
    %v469 = vstv %s468
    %v470 = vmul.f32 %v254, %v469
    %v471 = vmul.f32 %v255, %v469
    %v472 = vadd.f32 %v466, %v470
    %v473 = vadd.f32 %v467, %v471
    %s474 = sld [smem:[#allocation10 + $0x2]]
    %v475 = vstv %s474
    %v476 = vmul.f32 %v306, %v475
    %v477 = vmul.f32 %v307, %v475
    %v478 = vadd.f32 %v472, %v476
    %v479 = vadd.f32 %v473, %v477
    %s480 = sld [smem:[#allocation10 + $0x3]]
    %v481 = vstv %s480
    %v482 = vmul.f32 %v358, %v481
    %v483 = vmul.f32 %v359, %v481
    %v484 = vadd.f32 %v478, %v482
    %v485 = vadd.f32 %v479, %v483
    %s486 = sld [smem:[#allocation10 + $0x4]]
    %v487 = vstv %s486
    %v488 = vmul.f32 %v410, %v487
    %v489 = vmul.f32 %v411, %v487
    %v490 = vadd.f32 %v484, %v488
    %v491 = vadd.f32 %v485, %v489
    %s492 = sld [smem:[#allocation10 + $0x5]]
    %v493 = vstv %s492
    %v494 = vmul.f32 %v462, %v493
    %v495 = vmul.f32 %v463, %v493
    %v496 = vadd.f32 %v490, %v494
    %v497 = vadd.f32 %v491, %v495
    %s498 = sld [smem:[#allocation12]]
    %v499 = vstv %s498
    %v500 = vadd.f32 %v496, %v499
    %v501 = vadd.f32 %v497, %v499
    %v502 = vtanh.pop %v500
    %v503 = vtanh.pop %v501
    %s504 = sld [smem:[#allocation10 + $0x80]]
    %v505 = vstv %s504
    %v506 = vmul.f32 %v202, %v505
    %v507 = vmul.f32 %v203, %v505
    %s508 = sld [smem:[#allocation10 + $0x81]]
    %v509 = vstv %s508
    %v510 = vmul.f32 %v254, %v509
    %v511 = vmul.f32 %v255, %v509
    %v512 = vadd.f32 %v506, %v510
    %v513 = vadd.f32 %v507, %v511
    %s514 = sld [smem:[#allocation10 + $0x82]]
    %v515 = vstv %s514
    %v516 = vmul.f32 %v306, %v515
    %v517 = vmul.f32 %v307, %v515
    %v518 = vadd.f32 %v512, %v516
    %v519 = vadd.f32 %v513, %v517
    %s520 = sld [smem:[#allocation10 + $0x83]]
    %v521 = vstv %s520
    %v522 = vmul.f32 %v358, %v521
    %v523 = vmul.f32 %v359, %v521
    %v524 = vadd.f32 %v518, %v522
    %v525 = vadd.f32 %v519, %v523
    %s526 = sld [smem:[#allocation10 + $0x84]]
    %v527 = vstv %s526
    %v528 = vmul.f32 %v410, %v527
    %v529 = vmul.f32 %v411, %v527
    %v530 = vadd.f32 %v524, %v528
    %v531 = vadd.f32 %v525, %v529
    %s532 = sld [smem:[#allocation10 + $0x85]]
    %v533 = vstv %s532
    %v534 = vmul.f32 %v462, %v533
    %v535 = vmul.f32 %v463, %v533
    %v536 = vadd.f32 %v530, %v534
    %v537 = vadd.f32 %v531, %v535
    %s538 = sld [smem:[#allocation12 + $0x1]]
    %v539 = vstv %s538
    %v540 = vadd.f32 %v536, %v539
    %v541 = vadd.f32 %v537, %v539
    %v542 = vtanh.pop %v540
    %v543 = vtanh.pop %v541
    %s544 = sld [smem:[#allocation10 + $0x100]]
    %v545 = vstv %s544
    %v546 = vmul.f32 %v202, %v545
    %v547 = vmul.f32 %v203, %v545
    %s548 = sld [smem:[#allocation10 + $0x101]]
    %v549 = vstv %s548
    %v550 = vmul.f32 %v254, %v549
    %v551 = vmul.f32 %v255, %v549
    %v552 = vadd.f32 %v546, %v550
    %v553 = vadd.f32 %v547, %v551
    %s554 = sld [smem:[#allocation10 + $0x102]]
    %v555 = vstv %s554
    %v556 = vmul.f32 %v306, %v555
    %v557 = vmul.f32 %v307, %v555
    %v558 = vadd.f32 %v552, %v556
    %v559 = vadd.f32 %v553, %v557
    %s560 = sld [smem:[#allocation10 + $0x103]]
    %v561 = vstv %s560
    %v562 = vmul.f32 %v358, %v561
    %v563 = vmul.f32 %v359, %v561
    %v564 = vadd.f32 %v558, %v562
    %v565 = vadd.f32 %v559, %v563
    %s566 = sld [smem:[#allocation10 + $0x104]]
    %v567 = vstv %s566
    %v568 = vmul.f32 %v410, %v567
    %v569 = vmul.f32 %v411, %v567
    %v570 = vadd.f32 %v564, %v568
    %v571 = vadd.f32 %v565, %v569
    %s572 = sld [smem:[#allocation10 + $0x105]]
    %v573 = vstv %s572
    %v574 = vmul.f32 %v462, %v573
    %v575 = vmul.f32 %v463, %v573
    %v576 = vadd.f32 %v570, %v574
    %v577 = vadd.f32 %v571, %v575
    %s578 = sld [smem:[#allocation12 + $0x2]]
    %v579 = vstv %s578
    %v580 = vadd.f32 %v576, %v579
    %v581 = vadd.f32 %v577, %v579
    %v582 = vtanh.pop %v580
    %v583 = vtanh.pop %v581
    %s584 = sld [smem:[#allocation10 + $0x180]]
    %v585 = vstv %s584
    %v586 = vmul.f32 %v202, %v585
    %v587 = vmul.f32 %v203, %v585
    %s588 = sld [smem:[#allocation10 + $0x181]]
    %v589 = vstv %s588
    %v590 = vmul.f32 %v254, %v589
    %v591 = vmul.f32 %v255, %v589
    %v592 = vadd.f32 %v586, %v590
    %v593 = vadd.f32 %v587, %v591
    %s594 = sld [smem:[#allocation10 + $0x182]]
    %v595 = vstv %s594
    %v596 = vmul.f32 %v306, %v595
    %v597 = vmul.f32 %v307, %v595
    %v598 = vadd.f32 %v592, %v596
    %v599 = vadd.f32 %v593, %v597
    %s600 = sld [smem:[#allocation10 + $0x183]]
    %v601 = vstv %s600
    %v602 = vmul.f32 %v358, %v601
    %v603 = vmul.f32 %v359, %v601
    %v604 = vadd.f32 %v598, %v602
    %v605 = vadd.f32 %v599, %v603
    %s606 = sld [smem:[#allocation10 + $0x184]]
    %v607 = vstv %s606
    %v608 = vmul.f32 %v410, %v607
    %v609 = vmul.f32 %v411, %v607
    %v610 = vadd.f32 %v604, %v608
    %v611 = vadd.f32 %v605, %v609
    %s612 = sld [smem:[#allocation10 + $0x185]]
    %v613 = vstv %s612
    %v614 = vmul.f32 %v462, %v613
    %v615 = vmul.f32 %v463, %v613
    %v616 = vadd.f32 %v610, %v614
    %v617 = vadd.f32 %v611, %v615
    %s618 = sld [smem:[#allocation12 + $0x3]]
    %v619 = vstv %s618
    %v620 = vadd.f32 %v616, %v619
    %v621 = vadd.f32 %v617, %v619
    %v622 = vtanh.pop %v620
    %v623 = vtanh.pop %v621
    %s624 = sld [smem:[#allocation13]]
    %v625 = vstv %s624
    %v626 = vmul.f32 %v502, %v625
    %v627 = vmul.f32 %v503, %v625
    %s628 = sld [smem:[#allocation13 + $0x1]]
    %v629 = vstv %s628
    %v630 = vmul.f32 %v542, %v629
    %v631 = vmul.f32 %v543, %v629
    %v632 = vadd.f32 %v626, %v630
    %v633 = vadd.f32 %v627, %v631
    %s634 = sld [smem:[#allocation13 + $0x2]]
    %v635 = vstv %s634
    %v636 = vmul.f32 %v582, %v635
    %v637 = vmul.f32 %v583, %v635
    %v638 = vadd.f32 %v632, %v636
    %v639 = vadd.f32 %v633, %v637
    %s640 = sld [smem:[#allocation13 + $0x3]]
    %v641 = vstv %s640
    %v642 = vmul.f32 %v622, %v641
    %v643 = vmul.f32 %v623, %v641
    %v644 = vadd.f32 %v638, %v642
    %v645 = vadd.f32 %v639, %v643
    %s646 = sld [smem:[#allocation15]]
    %v647 = vstv %s646
    %v648 = vadd.f32 %v644, %v647
    %v649 = vadd.f32 %v645, %v647
    %v650 = vtanh.pop %v648
    %v651 = vtanh.pop %v649
    %s652 = sld [smem:[#allocation13 + $0x80]]
    %v653 = vstv %s652
    %v654 = vmul.f32 %v502, %v653
    %v655 = vmul.f32 %v503, %v653
    %s656 = sld [smem:[#allocation13 + $0x81]]
    %v657 = vstv %s656
    %v658 = vmul.f32 %v542, %v657
    %v659 = vmul.f32 %v543, %v657
    %v660 = vadd.f32 %v654, %v658
    %v661 = vadd.f32 %v655, %v659
    %s662 = sld [smem:[#allocation13 + $0x82]]
    %v663 = vstv %s662
    %v664 = vmul.f32 %v582, %v663
    %v665 = vmul.f32 %v583, %v663
    %v666 = vadd.f32 %v660, %v664
    %v667 = vadd.f32 %v661, %v665
    %s668 = sld [smem:[#allocation13 + $0x83]]
    %v669 = vstv %s668
    %v670 = vmul.f32 %v622, %v669
    %v671 = vmul.f32 %v623, %v669
    %v672 = vadd.f32 %v666, %v670
    %v673 = vadd.f32 %v667, %v671
    %s674 = sld [smem:[#allocation15 + $0x1]]
    %v675 = vstv %s674
    %v676 = vadd.f32 %v672, %v675
    %v677 = vadd.f32 %v673, %v675
    %v678 = vtanh.pop %v676
    %v679 = vtanh.pop %v677
    %s680 = sld [smem:[#allocation16]]
    %v681 = vstv %s680
    %v682 = vmul.f32 %v650, %v681
    %v683 = vmul.f32 %v651, %v681
    %s684 = sld [smem:[#allocation16 + $0x1]]
    %v685 = vstv %s684
    %v686 = vmul.f32 %v678, %v685
    %v687 = vmul.f32 %v679, %v685
    %v688 = vadd.f32 %v682, %v686
    %v689 = vadd.f32 %v683, %v687
    %s690 = sld [smem:[#allocation2]]
    %v691 = vstv %s690
    %v692 = vadd.f32 %v688, %v691
    %v693 = vadd.f32 %v689, %v691
    %v694 = vtanh.pop %v692
    %v695 = vtanh.pop %v693
    %v696 = vadd.f32 %v694, 1.0
    %v697 = vadd.f32 %v695, 1.0
    %v698 = vmul.f32 %v696, 0.5
    %v699 = vmul.f32 %v697, 0.5
    %700 = vst [vmem:[#allocation18] sm:$0xff] %v698
    %701 = vst [vmem:[#allocation18 + $0x8] sm:$0xff] %v699
    // Predicated region
    $region70: #{tpu_custom_call.1} parent=1 // pred_check
      _
    $region71: #{tpu_custom_call.1} parent=1 // pred_check_branch
      %703 = sbr.rel (0) target = $region73
    $region72: #{tpu_custom_call.1} parent=1 // pred_region
      %s705 = ssub.s32 256, 256
      %706 = vsyncadd [#allocation5], %s705
      %s708 = sshll.u32 [#allocation18], 4
      %s709 = int_to_ptr.vmem [resolvable:$true] %s708
      %711 = dma.vmem_to_hbm [thread:$0]  %s709, 256, %s9, [#allocation5]
    $region73: #{tpu_custom_call.1} parent=1 // pred_fallthru
      _
    // Predicated region
    $region74: #{tpu_custom_call.1} parent=1 // pred_check
      _
    $region75: #{tpu_custom_call.1} parent=1 // pred_check_branch
      %713 = sbr.rel (0) target = $region77
    $region76: #{tpu_custom_call.1} parent=1 // pred_region
      %714 = dma.done [#allocation5], 256
    $region77: #{tpu_custom_call.1} parent=1 // pred_fallthru
      _
    %715 = vsyncpa [#allocation4], 1
    %716 = vsyncpa [#allocation5], 1
    %717 = vsyncpa [#allocation6], 1
    %718 = vsyncpa [#allocation7], 1
    %719 = vsyncpa [#allocation11], 1
    %720 = vsyncpa [#allocation14], 1
    %721 = vsyncpa [#allocation17], 1

</llo_original>
